<compile_context>
chip_gen: v7x
topology: tpu7x:2x2x1
jax: 0.10.0
libtpu: 0.0.40
codegen_flags: <defaults>
</compile_context>

<pallas_src>
import math

import jax
import jax.numpy as jnp
from jax import lax
from jax.experimental import pallas as pl
from jax.experimental.pallas import tpu as pltpu

B, T, C = 2, 8, 32              # small shapes consistent with the module's forward
BT = B * T
LAYER_IDX = 1                   # > 0  =>  v_first residual-mixing path is exercised
DECAY = 0.95                    # RWKV-style per-step decay (scalar, static)
LOG_DECAY = math.log(DECAY)
C_SCALE = C ** -0.5
LOSS_SCALE = C_SCALE / BT       # fold mean(1/BT) and C**-0.5 into one constant
NOUT = 128                      # lane-dense fused output slab width
T_LOG2 = T.bit_length() - 1
assert (1 << T_LOG2) == T       # in-kernel batch-id uses a shift; T must be a power of 2


# ----------------------------- Pallas kernel ------------------------------- #

def _fused_kernel(x_ref, vf_ref, w_small_ref, w_out_ref, out_ref, loss_ref):
    """Fused student + teacher attention + distillation loss (layer_idx > 0 path).

    x_ref       : (BT, C)    bf16  hidden states, batch folded into rows
    vf_ref      : (BT, C)    f32   shared v_first state
    w_small_ref : (7C, C)    bf16  rows = [W_rk; W_qk; wv; wg; wvt; wo_s; wo_t]
    w_out_ref   : (2C, 128)  bf16  rows [0:C)=wo_s in cols [0:C); rows [C:2C)=wo_t in cols [C:2C)
    out_ref     : (BT, 128)  bf16  cols [0:C)=student_hidden, [C:2C)=teacher_hidden
    loss_ref    : (1, 1)     f32   SMEM scalar distillation loss
    """
    x = x_ref[...]                                  # (BT, C) bf16
    xf = x.astype(jnp.float32)                      # f32 rhs for the x.T score matmuls

    def wrow(i):                                    # aligned (C, C) row slice, no lane slicing
        return w_small_ref[i * C:(i + 1) * C, :]

    # Tiny projections ride the (otherwise idle) MXU; f32 accumulation.
    xr = jnp.dot(x, wrow(0), preferred_element_type=jnp.float32)   # x @ (wr wk^T)
    xq = jnp.dot(x, wrow(1), preferred_element_type=jnp.float32)   # x @ (wq C^-.5 wk_t^T)
    v = jnp.dot(x, wrow(2), preferred_element_type=jnp.float32)
    g = jnp.dot(x, wrow(3), preferred_element_type=jnp.float32)
    vt = jnp.dot(x, wrow(4), preferred_element_type=jnp.float32)

    # Block-diagonal causal masks generated in-kernel (iota/compare/exp -> VPU/EUP slack).
    row = lax.broadcasted_iota(jnp.int32, (BT, BT), 0)
    col = lax.broadcasted_iota(jnp.int32, (BT, BT), 1)
    same_b = jnp.right_shift(row, T_LOG2) == jnp.right_shift(col, T_LOG2)
    valid = jnp.logical_and(same_b, row >= col)
    dt = (row - col).astype(jnp.float32)
    dmask = jnp.where(valid, jnp.exp(dt * LOG_DECAY) * C_SCALE, 0.0)   # decay*C^-.5 folded

    # ----- student: RWKV-v7-style decayed linear attention + value-residual mix -----
    sig_g = 1.0 / (1.0 + jnp.exp(-g))               # explicit sigmoid (exp + div)
    v_mix = v + (vf_ref[...] - v) * sig_g           # layer_idx > 0 path
    s_scores = lax.dot_general(xr, xf, (((1,), (1,)), ((), ())),
                               preferred_element_type=jnp.float32)     # (BT, BT) f32
    o_s = jnp.dot(s_scores * dmask, v_mix,
                  preferred_element_type=jnp.float32)                  # (BT, C) f32

    # ----- teacher: causal softmax attention (score scale folded into W_qk) -----
    t_scores = lax.dot_general(xq, xf, (((1,), (1,)), ((), ())),
                               preferred_element_type=jnp.float32)     # (BT, BT) f32
    t_scores = jnp.where(valid, t_scores, -1e30)
    m = jnp.max(t_scores, axis=-1, keepdims=True)
    p = jnp.exp(t_scores - m)
    p = p * pl.reciprocal(jnp.sum(p, axis=-1, keepdims=True), approx=False)
    o_t = jnp.dot(p, vt, preferred_element_type=jnp.float32)           # (BT, C) f32

    # ----- fused output projections: one lane-dense (BT, 128) bf16 store, no concat -----
    y = (jnp.dot(o_s, w_out_ref[0:C, :], preferred_element_type=jnp.float32)
         + jnp.dot(o_t, w_out_ref[C:2 * C, :], preferred_element_type=jnp.float32))
    out_ref[...] = y.astype(out_ref.dtype)

    # ----- distillation loss: mean_rows ||teacher - student||_2 * C**-0.5 -----
    # diff via two tiny matmuls (idle MXU) instead of lane-slicing the f32 slab.
    s_hid = jnp.dot(o_s, wrow(5), preferred_element_type=jnp.float32)  # o_s @ wo_s
    t_hid = jnp.dot(o_t, wrow(6), preferred_element_type=jnp.float32)  # o_t @ wo_t
    diff = t_hid - s_hid
    norms = jnp.sqrt(jnp.sum(diff * diff, axis=-1, keepdims=True))     # (BT, 1)
    loss_ref[0, 0] = jnp.sum(norms) * LOSS_SCALE                       # single SMEM write


# ------------------------------ JAX wrappers ------------------------------- #

_vmem = pl.BlockSpec(memory_space=pltpu.MemorySpace.VMEM)
_smem = pl.BlockSpec(memory_space=pltpu.MemorySpace.SMEM)


def _prepare_weights(student_params, teacher_params):
    """Algebraically pre-fuse score weights and row-stack all small weights into
    one bf16 (7C, C) array; build the block-diagonal (2C, 128) output weight."""
    w_rk = student_params["wr"] @ student_params["wk"].T            # score fusion (student)
    w_qk = (teacher_params["wq"] * C_SCALE) @ teacher_params["wk"].T  # score fusion (teacher)
    w_small = jnp.concatenate(
        [w_rk, w_qk,
         student_params["wv"], student_params["wg"], teacher_params["wv"],
         student_params["wo"], teacher_params["wo"]],
        axis=0).astype(jnp.bfloat16)                                # (7C, C) = (224, 32)

    w_out = jnp.zeros((2 * C, NOUT), jnp.float32)
    w_out = w_out.at[:C, :C].set(student_params["wo"])
    w_out = w_out.at[C:, C:2 * C].set(teacher_params["wo"])
    return w_small, w_out.astype(jnp.bfloat16)                      # (2C, 128)


@jax.jit
def _fused_forward(hidden_states, v_first, w_small, w_out):
    x2d = hidden_states.reshape(BT, C).astype(jnp.bfloat16)
    vf2d = v_first.reshape(BT, C).astype(jnp.float32)
    slab, loss = pl.pallas_call(
        _fused_kernel,
        out_shape=(jax.ShapeDtypeStruct((BT, NOUT), jnp.bfloat16),
                   jax.ShapeDtypeStruct((1, 1), jnp.float32)),
        in_specs=[_vmem, _vmem, _vmem, _vmem],
        out_specs=(_vmem, _smem),
    )(x2d, vf2d, w_small, w_out)
    slab_f32 = slab.astype(jnp.float32)
    student_hidden = slab_f32[:, :C].reshape(B, T, C)
    teacher_hidden = slab_f32[:, C:2 * C].reshape(B, T, C)
    # layer_idx > 0: v_first is a pure passthrough (no kernel writeback at all).
    return student_hidden, teacher_hidden, v_first, loss[0, 0]


# --------------------------- AttentionWrapper port -------------------------- #

class Args:
    def __init__(self, grad_cp=0, stage=1):
        self.grad_cp = grad_cp
        self.stage = stage


class VFirstState:
    """Mirror of the shared v_first state holder."""
    def __init__(self, value):
        self.shared_state = value


class AttentionWrapper:
    def __init__(self, student_params, teacher_params, layer_idx, args):
        self.args = args
        self.layer_idx = layer_idx
        self.student_params = student_params   # trainable in torch
        self.teacher_params = teacher_params   # frozen (no_grad) in torch
        self.w_small, self.w_out = _prepare_weights(student_params, teacher_params)
        self.v_first_state = None              # attached externally, as in PyTorch
        # TODO(synk): layer_idx == 0 variant (v_first := projected v, vf input dropped,
        # v written into slab cols [2C:3C)) needs a second kernel signature; and training
        # would need a custom_vjp for the fused pallas_call (teacher under stop_gradient).
        assert layer_idx > 0, "this forward-only port implements the layer_idx > 0 path"

    def __call__(self, hidden_states, past_key_value=None):
        # output_attentions is forced False in the original; nothing to do here.
        v_first = self.v_first_state.shared_state              # .data.clone()

        # grad_cp==1 (deepspeed checkpointing) has identical forward math.
        student_hidden, teacher_hidden, v_first_out, loss = _fused_forward(
            hidden_states, v_first, self.w_small, self.w_out)

        self.v_first_state.shared_state = v_first_out           # .data.copy_(v_first)

        if self.args.stage != 1:
            # TODO(synk): a dedicated student-only kernel would skip the fused
            # teacher matmuls here; stage==1 is the distillation path of interest.
            return (student_hidden, None, past_key_value)

        # Teacher runs under torch.no_grad(); mirror with stop_gradient.
        teacher_hidden = lax.stop_gradient(teacher_hidden)
        return (teacher_hidden, loss, past_key_value)


# ---------------------------------- main ------------------------------------ #

if __name__ == "__main__":
    key = jax.random.PRNGKey(0)
    k_x, k_vf, *k_w = jax.random.split(key, 12)

    def init(k, shape):
        return jax.random.normal(k, shape, jnp.float32) * 0.02

    student_params = {n: init(k, (C, C))
                      for n, k in zip(("wr", "wk", "wv", "wg", "wo"), k_w[:5])}
    teacher_params = {n: init(k, (C, C))
                      for n, k in zip(("wq", "wk", "wv", "wo"), k_w[5:9])}

    hidden_states = jax.random.normal(k_x, (B, T, C), jnp.float32)
    v_first_init = jax.random.normal(k_vf, (B, T, C), jnp.float32)

    args = Args(grad_cp=0, stage=1)
    wrapper = AttentionWrapper(student_params, teacher_params,
                               layer_idx=LAYER_IDX, args=args)
    wrapper.v_first_state = VFirstState(v_first_init)

    out_hidden, loss, pkv = wrapper(hidden_states=hidden_states,
                                    past_key_value=None)
    jax.block_until_ready((out_hidden, loss, wrapper.v_first_state.shared_state))

    assert out_hidden.shape == (B, T, C)
    assert loss.shape == () and bool(jnp.isfinite(loss))
    print("KERNEL_OK")
</pallas_src>

<mosaic_0001>
module attributes {stable_mosaic.version = 11 : i64} {
  func.func @_fused_kernel(%arg0: memref<16x32xbf16, #tpu.memory_space<vmem>>, %arg1: memref<16x32xf32, #tpu.memory_space<vmem>>, %arg2: memref<224x32xbf16, #tpu.memory_space<vmem>>, %arg3: memref<64x128xbf16, #tpu.memory_space<vmem>>, %arg4: memref<16x128xbf16, #tpu.memory_space<vmem>>, %arg5: memref<1x1xf32, #tpu.memory_space<smem>>) attributes {dimension_semantics = [], scalar_prefetch = 0 : i64, scratch_operands = 0 : i64, tpu.core_type = #tpu.core_type<tc>} {
    %c0 = arith.constant 0 : index
    %c0_0 = arith.constant 0 : index
    %0 = vector.load %arg0[%c0, %c0_0] : memref<16x32xbf16, #tpu.memory_space<vmem>>, vector<16x32xbf16>
    %1 = arith.extf %0 : vector<16x32xbf16> to vector<16x32xf32>
    %c0_1 = arith.constant 0 : index
    %c0_2 = arith.constant 0 : index
    %2 = vector.load %arg2[%c0_1, %c0_2] : memref<224x32xbf16, #tpu.memory_space<vmem>>, vector<32x32xbf16>
    %cst = arith.constant dense<0.000000e+00> : vector<16x32xf32>
    %3 = tpu.matmul %0, %2, %cst {dimension_numbers = #tpu.dot_dimension_numbers<[1], [0], [0], [1], [0, 0, 1, 1], [], []>} : vector<16x32xbf16>, vector<32x32xbf16>, vector<16x32xf32> -> vector<16x32xf32>
    %c32 = arith.constant 32 : index
    %c0_3 = arith.constant 0 : index
    %4 = vector.load %arg2[%c32, %c0_3] : memref<224x32xbf16, #tpu.memory_space<vmem>>, vector<32x32xbf16>
    %cst_4 = arith.constant dense<0.000000e+00> : vector<16x32xf32>
    %5 = tpu.matmul %0, %4, %cst_4 {dimension_numbers = #tpu.dot_dimension_numbers<[1], [0], [0], [1], [0, 0, 1, 1], [], []>} : vector<16x32xbf16>, vector<32x32xbf16>, vector<16x32xf32> -> vector<16x32xf32>
    %c64 = arith.constant 64 : index
    %c0_5 = arith.constant 0 : index
    %6 = vector.load %arg2[%c64, %c0_5] : memref<224x32xbf16, #tpu.memory_space<vmem>>, vector<32x32xbf16>
    %cst_6 = arith.constant dense<0.000000e+00> : vector<16x32xf32>
    %7 = tpu.matmul %0, %6, %cst_6 {dimension_numbers = #tpu.dot_dimension_numbers<[1], [0], [0], [1], [0, 0, 1, 1], [], []>} : vector<16x32xbf16>, vector<32x32xbf16>, vector<16x32xf32> -> vector<16x32xf32>
    %c96 = arith.constant 96 : index
    %c0_7 = arith.constant 0 : index
    %8 = vector.load %arg2[%c96, %c0_7] : memref<224x32xbf16, #tpu.memory_space<vmem>>, vector<32x32xbf16>
    %cst_8 = arith.constant dense<0.000000e+00> : vector<16x32xf32>
    %9 = tpu.matmul %0, %8, %cst_8 {dimension_numbers = #tpu.dot_dimension_numbers<[1], [0], [0], [1], [0, 0, 1, 1], [], []>} : vector<16x32xbf16>, vector<32x32xbf16>, vector<16x32xf32> -> vector<16x32xf32>
    %c128 = arith.constant 128 : index
    %c0_9 = arith.constant 0 : index
    %10 = vector.load %arg2[%c128, %c0_9] : memref<224x32xbf16, #tpu.memory_space<vmem>>, vector<32x32xbf16>
    %cst_10 = arith.constant dense<0.000000e+00> : vector<16x32xf32>
    %11 = tpu.matmul %0, %10, %cst_10 {dimension_numbers = #tpu.dot_dimension_numbers<[1], [0], [0], [1], [0, 0, 1, 1], [], []>} : vector<16x32xbf16>, vector<32x32xbf16>, vector<16x32xf32> -> vector<16x32xf32>
    %12 = tpu.iota {dimensions = array<i32: 0>} : vector<16x16xi32>
    %13 = tpu.iota {dimensions = array<i32: 1>} : vector<16x16xi32>
    %c3_i32 = arith.constant 3 : i32
    %14 = vector.broadcast %c3_i32 : i32 to vector<16x16xi32>
    %15 = arith.shrsi %12, %14 : vector<16x16xi32>
    %c3_i32_11 = arith.constant 3 : i32
    %16 = vector.broadcast %c3_i32_11 : i32 to vector<16x16xi32>
    %17 = arith.shrsi %13, %16 : vector<16x16xi32>
    %18 = arith.cmpi eq, %15, %17 : vector<16x16xi32>
    %19 = arith.cmpi sge, %12, %13 : vector<16x16xi32>
    %20 = arith.andi %18, %19 : vector<16x16xi1>
    %21 = arith.subi %12, %13 : vector<16x16xi32>
    %22 = arith.sitofp %21 : vector<16x16xi32> to vector<16x16xf32>
    %cst_12 = arith.constant -0.0512932949 : f32
    %23 = vector.broadcast %cst_12 : f32 to vector<16x16xf32>
    %24 = arith.mulf %22, %23 : vector<16x16xf32>
    %25 = math.exp %24 : vector<16x16xf32>
    %cst_13 = arith.constant 0.176776692 : f32
    %26 = vector.broadcast %cst_13 : f32 to vector<16x16xf32>
    %27 = arith.mulf %25, %26 : vector<16x16xf32>
    %cst_14 = arith.constant 0.000000e+00 : f32
    %28 = vector.broadcast %cst_14 : f32 to vector<16x16xf32>
    %29 = arith.select %20, %27, %28 : vector<16x16xi1>, vector<16x16xf32>
    %cst_15 = arith.constant 0.000000e+00 : f32
    %30 = vector.broadcast %cst_15 : f32 to vector<16x32xf32>
    %31 = arith.subf %30, %9 : vector<16x32xf32>
    %32 = math.exp %31 : vector<16x32xf32>
    %cst_16 = arith.constant 1.000000e+00 : f32
    %33 = vector.broadcast %cst_16 : f32 to vector<16x32xf32>
    %34 = arith.addf %33, %32 : vector<16x32xf32>
    %cst_17 = arith.constant 1.000000e+00 : f32
    %35 = vector.broadcast %cst_17 : f32 to vector<16x32xf32>
    %36 = arith.divf %35, %34 : vector<16x32xf32>
    %c0_18 = arith.constant 0 : index
    %c0_19 = arith.constant 0 : index
    %37 = vector.load %arg1[%c0_18, %c0_19] : memref<16x32xf32, #tpu.memory_space<vmem>>, vector<16x32xf32>
    %38 = arith.subf %37, %7 : vector<16x32xf32>
    %39 = arith.mulf %38, %36 : vector<16x32xf32>
    %40 = arith.addf %7, %39 : vector<16x32xf32>
    %cst_20 = arith.constant dense<0.000000e+00> : vector<16x16xf32>
    %41 = tpu.matmul %3, %1, %cst_20 {dimension_numbers = #tpu.dot_dimension_numbers<[1], [1], [0], [0], [0, 0, 1, 0], [], []>} : vector<16x32xf32>, vector<16x32xf32>, vector<16x16xf32> -> vector<16x16xf32>
    %42 = arith.mulf %41, %29 : vector<16x16xf32>
    %cst_21 = arith.constant dense<0.000000e+00> : vector<16x32xf32>
    %43 = tpu.matmul %42, %40, %cst_21 {dimension_numbers = #tpu.dot_dimension_numbers<[1], [0], [0], [1], [0, 0, 1, 1], [], []>} : vector<16x16xf32>, vector<16x32xf32>, vector<16x32xf32> -> vector<16x32xf32>
    %cst_22 = arith.constant dense<0.000000e+00> : vector<16x16xf32>
    %44 = tpu.matmul %5, %1, %cst_22 {dimension_numbers = #tpu.dot_dimension_numbers<[1], [1], [0], [0], [0, 0, 1, 0], [], []>} : vector<16x32xf32>, vector<16x32xf32>, vector<16x16xf32> -> vector<16x16xf32>
    %cst_23 = arith.constant -1.000000e+30 : f32
    %45 = vector.broadcast %cst_23 : f32 to vector<16x16xf32>
    %46 = arith.select %20, %44, %45 : vector<16x16xi1>, vector<16x16xf32>
    %cst_24 = arith.constant dense<0xFF800000> : vector<16xf32>
    %47 = vector.multi_reduction <maximumf>, %46, %cst_24 [1] : vector<16x16xf32> to vector<16xf32>
    %48 = vector.shape_cast %47 : vector<16xf32> to vector<16x1xf32>
    %49 = vector.broadcast %48 : vector<16x1xf32> to vector<16x16xf32>
    %50 = arith.subf %46, %49 : vector<16x16xf32>
    %51 = math.exp %50 : vector<16x16xf32>
    %cst_25 = arith.constant dense<0.000000e+00> : vector<16xf32>
    %52 = vector.multi_reduction <add>, %51, %cst_25 [1] : vector<16x16xf32> to vector<16xf32>
    %53 = vector.shape_cast %52 : vector<16xf32> to vector<16x1xf32>
    %54 = tpu.reciprocal %53 : vector<16x1xf32> -> vector<16x1xf32>
    %55 = vector.broadcast %54 : vector<16x1xf32> to vector<16x16xf32>
    %56 = arith.mulf %51, %55 : vector<16x16xf32>
    %cst_26 = arith.constant dense<0.000000e+00> : vector<16x32xf32>
    %57 = tpu.matmul %56, %11, %cst_26 {dimension_numbers = #tpu.dot_dimension_numbers<[1], [0], [0], [1], [0, 0, 1, 1], [], []>} : vector<16x16xf32>, vector<16x32xf32>, vector<16x32xf32> -> vector<16x32xf32>
    %c0_27 = arith.constant 0 : index
    %c0_28 = arith.constant 0 : index
    %58 = vector.load %arg3[%c0_27, %c0_28] : memref<64x128xbf16, #tpu.memory_space<vmem>>, vector<32x128xbf16>
    %cst_29 = arith.constant dense<0.000000e+00> : vector<16x128xf32>
    %59 = tpu.matmul %43, %58, %cst_29 {dimension_numbers = #tpu.dot_dimension_numbers<[1], [0], [0], [1], [0, 0, 1, 1], [], []>} : vector<16x32xf32>, vector<32x128xbf16>, vector<16x128xf32> -> vector<16x128xf32>
    %c32_30 = arith.constant 32 : index
    %c0_31 = arith.constant 0 : index
    %60 = vector.load %arg3[%c32_30, %c0_31] : memref<64x128xbf16, #tpu.memory_space<vmem>>, vector<32x128xbf16>
    %cst_32 = arith.constant dense<0.000000e+00> : vector<16x128xf32>
    %61 = tpu.matmul %57, %60, %cst_32 {dimension_numbers = #tpu.dot_dimension_numbers<[1], [0], [0], [1], [0, 0, 1, 1], [], []>} : vector<16x32xf32>, vector<32x128xbf16>, vector<16x128xf32> -> vector<16x128xf32>
    %62 = arith.addf %59, %61 : vector<16x128xf32>
    %63 = arith.truncf %62 : vector<16x128xf32> to vector<16x128xbf16>
    %c0_33 = arith.constant 0 : index
    %c0_34 = arith.constant 0 : index
    %64 = vector.load %arg4[%c0_33, %c0_34] : memref<16x128xbf16, #tpu.memory_space<vmem>>, vector<16x128xbf16>
    tpu.vector_store %arg4[%c0_33, %c0_34], %63 {strides = array<i32>} : memref<16x128xbf16, #tpu.memory_space<vmem>>, vector<16x128xbf16>,
    %c160 = arith.constant 160 : index
    %c0_35 = arith.constant 0 : index
    %65 = vector.load %arg2[%c160, %c0_35] : memref<224x32xbf16, #tpu.memory_space<vmem>>, vector<32x32xbf16>
    %cst_36 = arith.constant dense<0.000000e+00> : vector<16x32xf32>
    %66 = tpu.matmul %43, %65, %cst_36 {dimension_numbers = #tpu.dot_dimension_numbers<[1], [0], [0], [1], [0, 0, 1, 1], [], []>} : vector<16x32xf32>, vector<32x32xbf16>, vector<16x32xf32> -> vector<16x32xf32>
    %c192 = arith.constant 192 : index
    %c0_37 = arith.constant 0 : index
    %67 = vector.load %arg2[%c192, %c0_37] : memref<224x32xbf16, #tpu.memory_space<vmem>>, vector<32x32xbf16>
    %cst_38 = arith.constant dense<0.000000e+00> : vector<16x32xf32>
    %68 = tpu.matmul %57, %67, %cst_38 {dimension_numbers = #tpu.dot_dimension_numbers<[1], [0], [0], [1], [0, 0, 1, 1], [], []>} : vector<16x32xf32>, vector<32x32xbf16>, vector<16x32xf32> -> vector<16x32xf32>
    %69 = arith.subf %68, %66 : vector<16x32xf32>
    %70 = arith.mulf %69, %69 : vector<16x32xf32>
    %cst_39 = arith.constant dense<0.000000e+00> : vector<16xf32>
    %71 = vector.multi_reduction <add>, %70, %cst_39 [1] : vector<16x32xf32> to vector<16xf32>
    %72 = vector.shape_cast %71 : vector<16xf32> to vector<16x1xf32>
    %73 = math.sqrt %72 : vector<16x1xf32>
    %74 = vector.shape_cast %73 : vector<16x1xf32> to vector<1x16x1xf32>
    %cst_40 = arith.constant dense<0.000000e+00> : vector<1xf32>
    %75 = vector.multi_reduction <add>, %74, %cst_40 [1, 2] : vector<1x16x1xf32> to vector<1xf32>
    %76 = vector.shape_cast %75 : vector<1xf32> to vector<1x1x1xf32>
    %77 = vector.extract %76[0, 0, 0] : f32 from vector<1x1x1xf32>
    %cst_41 = arith.constant 0.0110485433 : f32
    %78 = arith.mulf %77, %cst_41 : f32
    %c0_42 = arith.constant 0 : index
    %c0_43 = arith.constant 0 : index
    %79 = memref.load %arg5[%c0_42, %c0_43] : memref<1x1xf32, #tpu.memory_space<smem>>
    memref.store %78, %arg5[%c0_42, %c0_43] : memref<1x1xf32, #tpu.memory_space<smem>>
    return
  }
}

</mosaic_0001>

<llo_original>
// kernel: _fused_forward.1
$region0: #{_fused_forward.1}
  #allocation0 [shape = 'u32[]', space=smem, size = 0x4, offset = 0x4, fixed_abs, tag = 'smem constant byte address 0x4 - core index']
  #allocation1 [shape = 'u32[144,128]{1,0:T(1,128)}', space=vmem, size = 0x12000, scoped, tag = 'internal scratch']
  %s0 = inlined_call_operand.vmem [shape: bf16[16,32], index: 0, kind: input, shape index: {}]
  %s1 = inlined_call_operand.vmem [shape: f32[16,32], index: 1, kind: input, shape index: {}]
  %s2 = inlined_call_operand.vmem [shape: bf16[224,32], index: 2, kind: input, shape index: {}]
  %s3 = inlined_call_operand.vmem [shape: bf16[64,128], index: 3, kind: input, shape index: {}]
  %s4 = inlined_call_operand.vmem [shape: bf16[16,128], index: 4, kind: output, shape index: {0}]
  %s5 = inlined_call_operand.hbm [shape: f32[1,1], index: 5, kind: output, shape index: {1}]
  %6 = xla_tuple %s4, %s5
  %s7 = sld [smem:[#allocation0]]
  $region34: #{_fused_forward.1} parent=0
    _
  %s9 = ssub.s32 1, %s7
  %s10 = scalar_select 0, %s9, %s7
  $region1: #{_fused_forward.1} parent=0
    #allocation2 [shape = 'u8[512]{0}', space=smem, size = 0x200, scoped, tag = 'output window, operand 1, single buffered']
    #allocation3 [shape = 's32[1]{0}', space=sflag, size = 0x4, scoped, tag = 'scoped memory for _fused_forward.1']
    %11 = vsyncpa [#allocation3], 0
    // Predicated region
    $region2: #{_fused_forward.1} parent=1 // pred_check
      _
    $region3: #{_fused_forward.1} parent=1 // pred_check_branch
      %13 = sbr.rel (0) target = $region5
    $region4: #{_fused_forward.1} parent=1 // pred_region
      _
    $region5: #{_fused_forward.1} parent=1 // pred_fallthru
      _
    // Predicated region
    $region6: #{_fused_forward.1} parent=1 // pred_check
      _
    $region7: #{_fused_forward.1} parent=1 // pred_check_branch
      %15 = sbr.rel (0) target = $region9
    $region8: #{_fused_forward.1} parent=1 // pred_region
      _
    $region9: #{_fused_forward.1} parent=1 // pred_fallthru
      _
    // Predicated region
    $region10: #{_fused_forward.1} parent=1 // pred_check
      _
    $region11: #{_fused_forward.1} parent=1 // pred_check_branch
      %17 = sbr.rel (0) target = $region13
    $region12: #{_fused_forward.1} parent=1 // pred_region
      _
    $region13: #{_fused_forward.1} parent=1 // pred_fallthru
      _
    // Predicated region
    $region14: #{_fused_forward.1} parent=1 // pred_check
      _
    $region15: #{_fused_forward.1} parent=1 // pred_check_branch
      %19 = sbr.rel (0) target = $region17
    $region16: #{_fused_forward.1} parent=1 // pred_region
      _
    $region17: #{_fused_forward.1} parent=1 // pred_fallthru
      _
    %v21 = vld [vmem:[%s0] sm:$0xf]
    %v22 = vld [vmem:[%s0 + $0x4] sm:$0xf]
    %v23 = vunpack.c.l.bf16 %v21
    %v24 = vunpack.c.l.bf16 %v22
    %v25 = vld [vmem:[%s2] sm:$0xf]
    %v26 = vld [vmem:[%s2 + $0x4] sm:$0xf]
    %v27 = vld [vmem:[%s2 + $0x8] sm:$0xf]
    %v28 = vld [vmem:[%s2 + $0xc] sm:$0xf]
    %v31 = vunpack.c.l.b16 %v21
    %v32 = vunpack.c.l.b16 %v22
    %v33 = vpack.c.b16 %v32, %v31
    %v38 = vunpack.c.l.b16 %v25
    %v39 = vunpack.c.l.b16 %v26
    %v40 = vunpack.c.l.b16 %v27
    %v41 = vunpack.c.l.b16 %v28
    %v42 = vpack.c.b16 %v39, %v38
    %v43 = vpack.c.b16 %v41, %v40
    %vm46 = vcmask 261120
    %v48 = vsel %vm46, %v33, 0
    %50 = vmatprep.subr.bf16.mxu0 0
    %51 = vmatpush1.bf16.msra.mxu0 %v42
    %52 = vmatprep.subr.bf16.mxu0 0
    %53 = vmatpush1.bf16.msra.mxu0 %v43
    %54 = vmatprep.subr.bf16.mxu0 0
    %55 = vmatpush1.bf16.msra.mxu0 0
    %56 = vmatprep.subr.bf16.mxu0 0
    %57 = vmatpush1.bf16.msra.mxu0 0
    %58 = vmatprep.subr.bf16.mxu0 0
    %59 = vmatpush1.bf16.msra.mxu0 0
    %60 = vmatprep.subr.bf16.mxu0 0
    %61 = vmatpush1.bf16.msra.mxu0 0
    %62 = vmatprep.subr.bf16.mxu0 0
    %63 = vmatpush1.bf16.msra.mxu0 0
    %64 = vmatprep.subr.bf16.mxu0 0
    %65 = vmatpush1.bf16.msra.mxu0 0
    %66 = vmatprep.subr.bf16.mxu0 0
    %67 = vmatpush1.bf16.msra.mxu0 0
    %68 = vmatprep.subr.bf16.mxu0 0
    %69 = vmatpush1.bf16.msra.mxu0 0
    %70 = vmatprep.subr.bf16.mxu0 0
    %71 = vmatpush1.bf16.msra.mxu0 0
    %72 = vmatprep.subr.bf16.mxu0 0
    %73 = vmatpush1.bf16.msra.mxu0 0
    %74 = vmatprep.subr.bf16.mxu0 0
    %75 = vmatpush1.bf16.msra.mxu0 0
    %76 = vmatprep.subr.bf16.mxu0 0
    %77 = vmatpush1.bf16.msra.mxu0 0
    %78 = vmatprep.subr.bf16.mxu0 0
    %79 = vmatpush1.bf16.msra.mxu0 0
    %80 = vmatprep.subr.bf16.mxu0 0
    %81 = vmatpush1.bf16.msra.mxu0 0
    %82 = vmatprep.mubr.bf16.mxu0 0
    %83 = vmatmul.mubr.bf16.gmra.mrb[0].mxu0 %v48
    %v84 = vpop.f32.mrb[0].mxu0
    %v85 = vadd.f32 0.0, %v84
    %v86 = vpop.f32.mrb[0].mxu0
    %v87 = vpop.f32.mrb[0].mxu0
    %v88 = vadd.f32 0.0, %v87
    %v89 = vpop.f32.mrb[0].mxu0
    %90 = vdwg.mxu0
    %v91 = vld [vmem:[%s2 + $0x10] sm:$0xf]
    %v92 = vld [vmem:[%s2 + $0x14] sm:$0xf]
    %v93 = vld [vmem:[%s2 + $0x18] sm:$0xf]
    %v94 = vld [vmem:[%s2 + $0x1c] sm:$0xf]
    %v99 = vunpack.c.l.b16 %v91
    %v100 = vunpack.c.l.b16 %v92
    %v101 = vunpack.c.l.b16 %v93
    %v102 = vunpack.c.l.b16 %v94
    %v103 = vpack.c.b16 %v100, %v99
    %v104 = vpack.c.b16 %v102, %v101
    %107 = vmatprep.subr.bf16.mxu0 0
    %108 = vmatpush1.bf16.msra.mxu0 %v103
    %109 = vmatprep.subr.bf16.mxu0 0
    %110 = vmatpush1.bf16.msra.mxu0 %v104
    %111 = vmatprep.subr.bf16.mxu0 0
    %112 = vmatpush1.bf16.msra.mxu0 0
    %113 = vmatprep.subr.bf16.mxu0 0
    %114 = vmatpush1.bf16.msra.mxu0 0
    %115 = vmatprep.subr.bf16.mxu0 0
    %116 = vmatpush1.bf16.msra.mxu0 0
    %117 = vmatprep.subr.bf16.mxu0 0
    %118 = vmatpush1.bf16.msra.mxu0 0
    %119 = vmatprep.subr.bf16.mxu0 0
    %120 = vmatpush1.bf16.msra.mxu0 0
    %121 = vmatprep.subr.bf16.mxu0 0
    %122 = vmatpush1.bf16.msra.mxu0 0
    %123 = vmatprep.subr.bf16.mxu0 0
    %124 = vmatpush1.bf16.msra.mxu0 0
    %125 = vmatprep.subr.bf16.mxu0 0
    %126 = vmatpush1.bf16.msra.mxu0 0
    %127 = vmatprep.subr.bf16.mxu0 0
    %128 = vmatpush1.bf16.msra.mxu0 0
    %129 = vmatprep.subr.bf16.mxu0 0
    %130 = vmatpush1.bf16.msra.mxu0 0
    %131 = vmatprep.subr.bf16.mxu0 0
    %132 = vmatpush1.bf16.msra.mxu0 0
    %133 = vmatprep.subr.bf16.mxu0 0
    %134 = vmatpush1.bf16.msra.mxu0 0
    %135 = vmatprep.subr.bf16.mxu0 0
    %136 = vmatpush1.bf16.msra.mxu0 0
    %137 = vmatprep.subr.bf16.mxu0 0
    %138 = vmatpush1.bf16.msra.mxu0 0
    %139 = vmatprep.mubr.bf16.mxu0 0
    %140 = vmatmul.mubr.bf16.gmra.mrb[0].mxu0 %v48
    %v141 = vpop.f32.mrb[0].mxu0
    %v142 = vadd.f32 0.0, %v141
    %v143 = vpop.f32.mrb[0].mxu0
    %v144 = vpop.f32.mrb[0].mxu0
    %v145 = vadd.f32 0.0, %v144
    %v146 = vpop.f32.mrb[0].mxu0
    %147 = vdwg.mxu0
    %v148 = vld [vmem:[%s2 + $0x20] sm:$0xf]
    %v149 = vld [vmem:[%s2 + $0x24] sm:$0xf]
    %v150 = vld [vmem:[%s2 + $0x28] sm:$0xf]
    %v151 = vld [vmem:[%s2 + $0x2c] sm:$0xf]
    %v156 = vunpack.c.l.b16 %v148
    %v157 = vunpack.c.l.b16 %v149
    %v158 = vunpack.c.l.b16 %v150
    %v159 = vunpack.c.l.b16 %v151
    %v160 = vpack.c.b16 %v157, %v156
    %v161 = vpack.c.b16 %v159, %v158
    %164 = vmatprep.subr.bf16.mxu0 0
    %165 = vmatpush1.bf16.msra.mxu0 %v160
    %166 = vmatprep.subr.bf16.mxu0 0
    %167 = vmatpush1.bf16.msra.mxu0 %v161
    %168 = vmatprep.subr.bf16.mxu0 0
    %169 = vmatpush1.bf16.msra.mxu0 0
    %170 = vmatprep.subr.bf16.mxu0 0
    %171 = vmatpush1.bf16.msra.mxu0 0
    %172 = vmatprep.subr.bf16.mxu0 0
    %173 = vmatpush1.bf16.msra.mxu0 0
    %174 = vmatprep.subr.bf16.mxu0 0
    %175 = vmatpush1.bf16.msra.mxu0 0
    %176 = vmatprep.subr.bf16.mxu0 0
    %177 = vmatpush1.bf16.msra.mxu0 0
    %178 = vmatprep.subr.bf16.mxu0 0
    %179 = vmatpush1.bf16.msra.mxu0 0
    %180 = vmatprep.subr.bf16.mxu0 0
    %181 = vmatpush1.bf16.msra.mxu0 0
    %182 = vmatprep.subr.bf16.mxu0 0
    %183 = vmatpush1.bf16.msra.mxu0 0
    %184 = vmatprep.subr.bf16.mxu0 0
    %185 = vmatpush1.bf16.msra.mxu0 0
    %186 = vmatprep.subr.bf16.mxu0 0
    %187 = vmatpush1.bf16.msra.mxu0 0
    %188 = vmatprep.subr.bf16.mxu0 0
    %189 = vmatpush1.bf16.msra.mxu0 0
    %190 = vmatprep.subr.bf16.mxu0 0
    %191 = vmatpush1.bf16.msra.mxu0 0
    %192 = vmatprep.subr.bf16.mxu0 0
    %193 = vmatpush1.bf16.msra.mxu0 0
    %194 = vmatprep.subr.bf16.mxu0 0
    %195 = vmatpush1.bf16.msra.mxu0 0
    %196 = vmatprep.mubr.bf16.mxu0 0
    %197 = vmatmul.mubr.bf16.gmra.mrb[0].mxu0 %v48
    %v198 = vpop.f32.mrb[0].mxu0
    %v199 = vadd.f32 0.0, %v198
    %v200 = vpop.f32.mrb[0].mxu0
    %v201 = vpop.f32.mrb[0].mxu0
    %v202 = vadd.f32 0.0, %v201
    %v203 = vpop.f32.mrb[0].mxu0
    %204 = vdwg.mxu0
    %v205 = vld [vmem:[%s2 + $0x30] sm:$0xf]
    %v206 = vld [vmem:[%s2 + $0x34] sm:$0xf]
    %v207 = vld [vmem:[%s2 + $0x38] sm:$0xf]
    %v208 = vld [vmem:[%s2 + $0x3c] sm:$0xf]
    %v213 = vunpack.c.l.b16 %v205
    %v214 = vunpack.c.l.b16 %v206
    %v215 = vunpack.c.l.b16 %v207
    %v216 = vunpack.c.l.b16 %v208
    %v217 = vpack.c.b16 %v214, %v213
    %v218 = vpack.c.b16 %v216, %v215
    %221 = vmatprep.subr.bf16.mxu0 0
    %222 = vmatpush1.bf16.msra.mxu0 %v217
    %223 = vmatprep.subr.bf16.mxu0 0
    %224 = vmatpush1.bf16.msra.mxu0 %v218
    %225 = vmatprep.subr.bf16.mxu0 0
    %226 = vmatpush1.bf16.msra.mxu0 0
    %227 = vmatprep.subr.bf16.mxu0 0
    %228 = vmatpush1.bf16.msra.mxu0 0
    %229 = vmatprep.subr.bf16.mxu0 0
    %230 = vmatpush1.bf16.msra.mxu0 0
    %231 = vmatprep.subr.bf16.mxu0 0
    %232 = vmatpush1.bf16.msra.mxu0 0
    %233 = vmatprep.subr.bf16.mxu0 0
    %234 = vmatpush1.bf16.msra.mxu0 0
    %235 = vmatprep.subr.bf16.mxu0 0
    %236 = vmatpush1.bf16.msra.mxu0 0
    %237 = vmatprep.subr.bf16.mxu0 0
    %238 = vmatpush1.bf16.msra.mxu0 0
    %239 = vmatprep.subr.bf16.mxu0 0
    %240 = vmatpush1.bf16.msra.mxu0 0
    %241 = vmatprep.subr.bf16.mxu0 0
    %242 = vmatpush1.bf16.msra.mxu0 0
    %243 = vmatprep.subr.bf16.mxu0 0
    %244 = vmatpush1.bf16.msra.mxu0 0
    %245 = vmatprep.subr.bf16.mxu0 0
    %246 = vmatpush1.bf16.msra.mxu0 0
    %247 = vmatprep.subr.bf16.mxu0 0
    %248 = vmatpush1.bf16.msra.mxu0 0
    %249 = vmatprep.subr.bf16.mxu0 0
    %250 = vmatpush1.bf16.msra.mxu0 0
    %251 = vmatprep.subr.bf16.mxu0 0
    %252 = vmatpush1.bf16.msra.mxu0 0
    %253 = vmatprep.mubr.bf16.mxu0 0
    %254 = vmatmul.mubr.bf16.gmra.mrb[0].mxu0 %v48
    %v255 = vpop.f32.mrb[0].mxu0
    %v256 = vadd.f32 0.0, %v255
    %v257 = vpop.f32.mrb[0].mxu0
    %v258 = vpop.f32.mrb[0].mxu0
    %v259 = vadd.f32 0.0, %v258
    %v260 = vpop.f32.mrb[0].mxu0
    %261 = vdwg.mxu0
    %v262 = vld [vmem:[%s2 + $0x40] sm:$0xf]
    %v263 = vld [vmem:[%s2 + $0x44] sm:$0xf]
    %v264 = vld [vmem:[%s2 + $0x48] sm:$0xf]
    %v265 = vld [vmem:[%s2 + $0x4c] sm:$0xf]
    %v270 = vunpack.c.l.b16 %v262
    %v271 = vunpack.c.l.b16 %v263
    %v272 = vunpack.c.l.b16 %v264
    %v273 = vunpack.c.l.b16 %v265
    %v274 = vpack.c.b16 %v271, %v270
    %v275 = vpack.c.b16 %v273, %v272
    %278 = vmatprep.subr.bf16.mxu0 0
    %279 = vmatpush1.bf16.msra.mxu0 %v274
    %280 = vmatprep.subr.bf16.mxu0 0
    %281 = vmatpush1.bf16.msra.mxu0 %v275
    %282 = vmatprep.subr.bf16.mxu0 0
    %283 = vmatpush1.bf16.msra.mxu0 0
    %284 = vmatprep.subr.bf16.mxu0 0
    %285 = vmatpush1.bf16.msra.mxu0 0
    %286 = vmatprep.subr.bf16.mxu0 0
    %287 = vmatpush1.bf16.msra.mxu0 0
    %288 = vmatprep.subr.bf16.mxu0 0
    %289 = vmatpush1.bf16.msra.mxu0 0
    %290 = vmatprep.subr.bf16.mxu0 0
    %291 = vmatpush1.bf16.msra.mxu0 0
    %292 = vmatprep.subr.bf16.mxu0 0
    %293 = vmatpush1.bf16.msra.mxu0 0
    %294 = vmatprep.subr.bf16.mxu0 0
    %295 = vmatpush1.bf16.msra.mxu0 0
    %296 = vmatprep.subr.bf16.mxu0 0
    %297 = vmatpush1.bf16.msra.mxu0 0
    %298 = vmatprep.subr.bf16.mxu0 0
    %299 = vmatpush1.bf16.msra.mxu0 0
    %300 = vmatprep.subr.bf16.mxu0 0
    %301 = vmatpush1.bf16.msra.mxu0 0
    %302 = vmatprep.subr.bf16.mxu0 0
    %303 = vmatpush1.bf16.msra.mxu0 0
    %304 = vmatprep.subr.bf16.mxu0 0
    %305 = vmatpush1.bf16.msra.mxu0 0
    %306 = vmatprep.subr.bf16.mxu0 0
    %307 = vmatpush1.bf16.msra.mxu0 0
    %308 = vmatprep.subr.bf16.mxu0 0
    %309 = vmatpush1.bf16.msra.mxu0 0
    %310 = vmatprep.mubr.bf16.mxu0 0
    %311 = vmatmul.mubr.bf16.gmra.mrb[0].mxu0 %v48
    %v312 = vpop.f32.mrb[0].mxu0
    %v313 = vadd.f32 0.0, %v312
    %v314 = vpop.f32.mrb[0].mxu0
    %v315 = vpop.f32.mrb[0].mxu0
    %v316 = vadd.f32 0.0, %v315
    %v317 = vpop.f32.mrb[0].mxu0
    %318 = vdwg.mxu0
    %v319 = vlaneseq
    %v320 = vshrl.u32 %v319, 7
    %v321 = vadd.s32 %v320, 8
    %v322 = vlaneseq
    %v323 = vand.u32 %v322, 127
    %v324 = vshra.s32 %v320, 3
    %v325 = vshra.s32 %v321, 3
    %v326 = vshra.s32 %v323, 3
    %vm327 = vcmp.eq.s32.totalorder %v324, %v326
    %vm328 = vcmp.eq.s32.totalorder %v325, %v326
    %vm329 = vcmp.ge.s32.totalorder %v320, %v323
    %vm330 = vcmp.ge.s32.totalorder %v321, %v323
    %vm331 = vmand %vm327, %vm329
    %vm332 = vmand %vm328, %vm330
    %v333 = vsub.s32 %v320, %v323
    %v334 = vsub.s32 %v321, %v323
    %v335 = vcvt.s32.f32 %v333
    %v336 = vcvt.s32.f32 %v334
    %v337 = vmul.f32 %v335, -0.051293295
    %v338 = vmul.f32 %v336, -0.051293295
    %v339 = vmul.f32 %v337, 1.442695
    %v340 = vpow.pop %v339
    %v341 = vmul.f32 %v338, 1.442695
    %v342 = vpow.pop %v341
    %v343 = vmul.f32 %v340, 0.17677669
    %v344 = vmul.f32 %v342, 0.17677669
    %v345 = vsel %vm331, %v343, 0.0
    %v346 = vsel %vm332, %v344, 0.0
    %v347 = vsub.f32 0.0, %v256
    %v348 = vsub.f32 0.0, %v259
    %v349 = vmul.f32 %v347, 1.442695
    %v350 = vpow.pop %v349
    %v351 = vmul.f32 %v348, 1.442695
    %v352 = vpow.pop %v351
    %v353 = vadd.f32 %v350, 1.0
    %v354 = vadd.f32 %v352, 1.0
    %v355 = vrcp.pop %v353
    %v356 = vmul.f32 1.0, %v355
    %v357 = vrcp.pop %v354
    %v358 = vmul.f32 1.0, %v357
    %v359 = vld [vmem:[%s1] sm:$0xff]
    %v360 = vld [vmem:[%s1 + $0x8] sm:$0xff]
    %v361 = vsub.f32 %v359, %v199
    %v362 = vsub.f32 %v360, %v202
    %v363 = vmul.f32 %v361, %v356
    %v364 = vmul.f32 %v362, %v358
    %v365 = vadd.f32 %v199, %v363
    %v366 = vadd.f32 %v202, %v364
    %v368 = vsel %vm46, %v85, 0
    %v371 = vsel %vm46, %v88, 0
    %v374 = vsel %vm46, %v23, 0
    %v377 = vsel %vm46, %v24, 0
    %379 = vmatprep.subr.mxu0 0.0
    %380 = vmatpush1.xpose.msra.mxu0 %v374
    %381 = vmatprep.subr.mxu0 0.0
    %382 = vmatpush1.xpose.msra.mxu0 %v377
    %383 = vmatprep.subr.mxu0 0.0
    %384 = vmatpush1.xpose.msra.mxu0 0.0
    %385 = vmatprep.subr.mxu0 0.0
    %386 = vmatpush1.xpose.msra.mxu0 0.0
    %387 = vmatprep.subr.mxu0 0.0
    %388 = vmatpush1.xpose.msra.mxu0 0.0
    %389 = vmatprep.subr.mxu0 0.0
    %390 = vmatpush1.xpose.msra.mxu0 0.0
    %391 = vmatprep.subr.mxu0 0.0
    %392 = vmatpush1.xpose.msra.mxu0 0.0
    %393 = vmatprep.subr.mxu0 0.0
    %394 = vmatpush1.xpose.msra.mxu0 0.0
    %395 = vmatprep.subr.mxu0 0.0
    %396 = vmatpush1.xpose.msra.mxu0 0.0
    %397 = vmatprep.subr.mxu0 0.0
    %398 = vmatpush1.xpose.msra.mxu0 0.0
    %399 = vmatprep.subr.mxu0 0.0
    %400 = vmatpush1.xpose.msra.mxu0 0.0
    %401 = vmatprep.subr.mxu0 0.0
    %402 = vmatpush1.xpose.msra.mxu0 0.0
    %403 = vmatprep.subr.mxu0 0.0
    %404 = vmatpush1.xpose.msra.mxu0 0.0
    %405 = vmatprep.subr.mxu0 0.0
    %406 = vmatpush1.xpose.msra.mxu0 0.0
    %407 = vmatprep.subr.mxu0 0.0
    %408 = vmatpush1.xpose.msra.mxu0 0.0
    %409 = vmatprep.subr.mxu0 0.0
    %410 = vmatpush1.xpose.msra.mxu0 0.0
    %411 = vmatprep.subr.mxu0 0.0
    %412 = vmatpush1.xpose.msra.mxu0 0.0
    %413 = vmatprep.subr.mxu0 0.0
    %414 = vmatpush1.xpose.msra.mxu0 0.0
    %415 = vmatprep.subr.mxu0 0.0
    %416 = vmatpush1.xpose.msra.mxu0 0.0
    %417 = vmatprep.subr.mxu0 0.0
    %418 = vmatpush1.xpose.msra.mxu0 0.0
    %419 = vmatprep.subr.mxu0 0.0
    %420 = vmatpush1.xpose.msra.mxu0 0.0
    %421 = vmatprep.subr.mxu0 0.0
    %422 = vmatpush1.xpose.msra.mxu0 0.0
    %423 = vmatprep.subr.mxu0 0.0
    %424 = vmatpush1.xpose.msra.mxu0 0.0
    %425 = vmatprep.subr.mxu0 0.0
    %426 = vmatpush1.xpose.msra.mxu0 0.0
    %427 = vmatprep.subr.mxu0 0.0
    %428 = vmatpush1.xpose.msra.mxu0 0.0
    %429 = vmatprep.subr.mxu0 0.0
    %430 = vmatpush1.xpose.msra.mxu0 0.0
    %431 = vmatprep.subr.mxu0 0.0
    %432 = vmatpush1.xpose.msra.mxu0 0.0
    %433 = vmatprep.subr.mxu0 0.0
    %434 = vmatpush1.xpose.msra.mxu0 0.0
    %435 = vmatprep.subr.mxu0 0.0
    %436 = vmatpush1.xpose.msra.mxu0 0.0
    %437 = vmatprep.subr.mxu0 0.0
    %438 = vmatpush1.xpose.msra.mxu0 0.0
    %439 = vmatprep.subr.mxu0 0.0
    %440 = vmatpush1.xpose.msra.mxu0 0.0
    %441 = vmatprep.subr.mxu0 0.0
    %442 = vmatpush1.xpose.msra.mxu0 0.0
    %443 = vmatprep.mubr.f32.mxu0 0.0
    %444 = vmatmul.mubr.f32.gmra.mrb[0].mxu0 %v368
    %v445 = vpop.f32.mrb[0].mxu0
    %v446 = vadd.f32 0.0, %v445
    %v447 = vpop.f32.mrb[0].mxu0
    %448 = vmatprep.mubr.f32.mxu0 0.0
    %449 = vmatmul.mubr.f32.gmra.mrb[0].mxu0 %v371
    %v450 = vpop.f32.mrb[0].mxu0
    %v451 = vadd.f32 0.0, %v450
    %v452 = vpop.f32.mrb[0].mxu0
    %453 = vdwg.mxu0
    %v454 = vmul.f32 %v446, %v345
    %v455 = vmul.f32 %v451, %v346
    %vm456 = vcmask 130048
    %v458 = vsel %vm456, %v454, 0
    %v461 = vsel %vm456, %v455, 0
    %463 = vmatprep.subr.mxu0 0.0
    %464 = vmatpush1.msra.mxu0 %v365
    %465 = vmatprep.subr.mxu0 0.0
    %466 = vmatpush1.msra.mxu0 %v366
    %467 = vmatprep.subr.mxu0 0.0
    %468 = vmatpush1.msra.mxu0 0.0
    %469 = vmatprep.subr.mxu0 0.0
    %470 = vmatpush1.msra.mxu0 0.0
    %471 = vmatprep.subr.mxu0 0.0
    %472 = vmatpush1.msra.mxu0 0.0
    %473 = vmatprep.subr.mxu0 0.0
    %474 = vmatpush1.msra.mxu0 0.0
    %475 = vmatprep.subr.mxu0 0.0
    %476 = vmatpush1.msra.mxu0 0.0
    %477 = vmatprep.subr.mxu0 0.0
    %478 = vmatpush1.msra.mxu0 0.0
    %479 = vmatprep.subr.mxu0 0.0
    %480 = vmatpush1.msra.mxu0 0.0
    %481 = vmatprep.subr.mxu0 0.0
    %482 = vmatpush1.msra.mxu0 0.0
    %483 = vmatprep.subr.mxu0 0.0
    %484 = vmatpush1.msra.mxu0 0.0
    %485 = vmatprep.subr.mxu0 0.0
    %486 = vmatpush1.msra.mxu0 0.0
    %487 = vmatprep.subr.mxu0 0.0
    %488 = vmatpush1.msra.mxu0 0.0
    %489 = vmatprep.subr.mxu0 0.0
    %490 = vmatpush1.msra.mxu0 0.0
    %491 = vmatprep.subr.mxu0 0.0
    %492 = vmatpush1.msra.mxu0 0.0
    %493 = vmatprep.subr.mxu0 0.0
    %494 = vmatpush1.msra.mxu0 0.0
    %495 = vmatprep.subr.mxu0 0.0
    %496 = vmatpush1.msra.mxu0 0.0
    %497 = vmatprep.subr.mxu0 0.0
    %498 = vmatpush1.msra.mxu0 0.0
    %499 = vmatprep.subr.mxu0 0.0
    %500 = vmatpush1.msra.mxu0 0.0
    %501 = vmatprep.subr.mxu0 0.0
    %502 = vmatpush1.msra.mxu0 0.0
    %503 = vmatprep.subr.mxu0 0.0
    %504 = vmatpush1.msra.mxu0 0.0
    %505 = vmatprep.subr.mxu0 0.0
    %506 = vmatpush1.msra.mxu0 0.0
    %507 = vmatprep.subr.mxu0 0.0
    %508 = vmatpush1.msra.mxu0 0.0
    %509 = vmatprep.subr.mxu0 0.0
    %510 = vmatpush1.msra.mxu0 0.0
    %511 = vmatprep.subr.mxu0 0.0
    %512 = vmatpush1.msra.mxu0 0.0
    %513 = vmatprep.subr.mxu0 0.0
    %514 = vmatpush1.msra.mxu0 0.0
    %515 = vmatprep.subr.mxu0 0.0
    %516 = vmatpush1.msra.mxu0 0.0
    %517 = vmatprep.subr.mxu0 0.0
    %518 = vmatpush1.msra.mxu0 0.0
    %519 = vmatprep.subr.mxu0 0.0
    %520 = vmatpush1.msra.mxu0 0.0
    %521 = vmatprep.subr.mxu0 0.0
    %522 = vmatpush1.msra.mxu0 0.0
    %523 = vmatprep.subr.mxu0 0.0
    %524 = vmatpush1.msra.mxu0 0.0
    %525 = vmatprep.subr.mxu0 0.0
    %526 = vmatpush1.msra.mxu0 0.0
    %527 = vmatprep.mubr.f32.mxu0 0.0
    %528 = vmatmul.mubr.f32.gmra.mrb[0].mxu0 %v458
    %v529 = vpop.f32.mrb[0].mxu0
    %v530 = vadd.f32 0.0, %v529
    %v531 = vpop.f32.mrb[0].mxu0
    %532 = vmatprep.mubr.f32.mxu0 0.0
    %533 = vmatmul.mubr.f32.gmra.mrb[0].mxu0 %v461
    %v534 = vpop.f32.mrb[0].mxu0
    %v535 = vadd.f32 0.0, %v534
    %v536 = vpop.f32.mrb[0].mxu0
    %537 = vdwg.mxu0
    %v539 = vsel %vm46, %v142, 0
    %v542 = vsel %vm46, %v145, 0
    %544 = vmatprep.subr.mxu0 0.0
    %545 = vmatpush1.xpose.msra.mxu0 %v374
    %546 = vmatprep.subr.mxu0 0.0
    %547 = vmatpush1.xpose.msra.mxu0 %v377
    %548 = vmatprep.subr.mxu0 0.0
    %549 = vmatpush1.xpose.msra.mxu0 0.0
    %550 = vmatprep.subr.mxu0 0.0
    %551 = vmatpush1.xpose.msra.mxu0 0.0
    %552 = vmatprep.subr.mxu0 0.0
    %553 = vmatpush1.xpose.msra.mxu0 0.0
    %554 = vmatprep.subr.mxu0 0.0
    %555 = vmatpush1.xpose.msra.mxu0 0.0
    %556 = vmatprep.subr.mxu0 0.0
    %557 = vmatpush1.xpose.msra.mxu0 0.0
    %558 = vmatprep.subr.mxu0 0.0
    %559 = vmatpush1.xpose.msra.mxu0 0.0
    %560 = vmatprep.subr.mxu0 0.0
    %561 = vmatpush1.xpose.msra.mxu0 0.0
    %562 = vmatprep.subr.mxu0 0.0
    %563 = vmatpush1.xpose.msra.mxu0 0.0
    %564 = vmatprep.subr.mxu0 0.0
    %565 = vmatpush1.xpose.msra.mxu0 0.0
    %566 = vmatprep.subr.mxu0 0.0
    %567 = vmatpush1.xpose.msra.mxu0 0.0
    %568 = vmatprep.subr.mxu0 0.0
    %569 = vmatpush1.xpose.msra.mxu0 0.0
    %570 = vmatprep.subr.mxu0 0.0
    %571 = vmatpush1.xpose.msra.mxu0 0.0
    %572 = vmatprep.subr.mxu0 0.0
    %573 = vmatpush1.xpose.msra.mxu0 0.0
    %574 = vmatprep.subr.mxu0 0.0
    %575 = vmatpush1.xpose.msra.mxu0 0.0
    %576 = vmatprep.subr.mxu0 0.0
    %577 = vmatpush1.xpose.msra.mxu0 0.0
    %578 = vmatprep.subr.mxu0 0.0
    %579 = vmatpush1.xpose.msra.mxu0 0.0
    %580 = vmatprep.subr.mxu0 0.0
    %581 = vmatpush1.xpose.msra.mxu0 0.0
    %582 = vmatprep.subr.mxu0 0.0
    %583 = vmatpush1.xpose.msra.mxu0 0.0
    %584 = vmatprep.subr.mxu0 0.0
    %585 = vmatpush1.xpose.msra.mxu0 0.0
    %586 = vmatprep.subr.mxu0 0.0
    %587 = vmatpush1.xpose.msra.mxu0 0.0
    %588 = vmatprep.subr.mxu0 0.0
    %589 = vmatpush1.xpose.msra.mxu0 0.0
    %590 = vmatprep.subr.mxu0 0.0
    %591 = vmatpush1.xpose.msra.mxu0 0.0
    %592 = vmatprep.subr.mxu0 0.0
    %593 = vmatpush1.xpose.msra.mxu0 0.0
    %594 = vmatprep.subr.mxu0 0.0
    %595 = vmatpush1.xpose.msra.mxu0 0.0
    %596 = vmatprep.subr.mxu0 0.0
    %597 = vmatpush1.xpose.msra.mxu0 0.0
    %598 = vmatprep.subr.mxu0 0.0
    %599 = vmatpush1.xpose.msra.mxu0 0.0
    %600 = vmatprep.subr.mxu0 0.0
    %601 = vmatpush1.xpose.msra.mxu0 0.0
    %602 = vmatprep.subr.mxu0 0.0
    %603 = vmatpush1.xpose.msra.mxu0 0.0
    %604 = vmatprep.subr.mxu0 0.0
    %605 = vmatpush1.xpose.msra.mxu0 0.0
    %606 = vmatprep.subr.mxu0 0.0
    %607 = vmatpush1.xpose.msra.mxu0 0.0
    %608 = vmatprep.mubr.f32.mxu0 0.0
    %609 = vmatmul.mubr.f32.gmra.mrb[0].mxu0 %v539
    %v610 = vpop.f32.mrb[0].mxu0
    %v611 = vadd.f32 0.0, %v610
    %v612 = vpop.f32.mrb[0].mxu0
    %613 = vmatprep.mubr.f32.mxu0 0.0
    %614 = vmatmul.mubr.f32.gmra.mrb[0].mxu0 %v542
    %v615 = vpop.f32.mrb[0].mxu0
    %v616 = vadd.f32 0.0, %v615
    %v617 = vpop.f32.mrb[0].mxu0
    %618 = vdwg.mxu0
    %v619 = vsel %vm331, %v611, -1e+30
    %v620 = vsel %vm332, %v616, -1e+30
    %v621 = vsel %vm456, %v619, -inf
    %622 = vmax.xlane.f32.xlu0 %v621
    %v623 = vpop.xlane.xlu0 %622
    %v624 = vsel %vm456, %v620, -inf
    %625 = vmax.xlane.f32.xlu0 %v624
    %v626 = vpop.xlane.xlu0 %625
    %v627 = vsub.f32 %v619, %v623
    %v628 = vsub.f32 %v620, %v626
    %v629 = vmul.f32 %v627, 1.442695
    %v630 = vpow.pop %v629
    %v631 = vmul.f32 %v628, 1.442695
    %v632 = vpow.pop %v631
    %v633 = vsel %vm456, %v630, 0.0
    %634 = vadd.xlane.f32.xlu0 %v633
    %v635 = vpop.xlane.xlu0 %634
    %v636 = vsel %vm456, %v632, 0.0
    %637 = vadd.xlane.f32.xlu0 %v636
    %v638 = vpop.xlane.xlu0 %637
    %v639 = vrcp.pop %v635
    %v640 = vrcp.pop %v638
    %v641 = vmul.f32 %v630, %v639
    %v642 = vmul.f32 %v632, %v640
    %v644 = vsel %vm456, %v641, 0
    %v647 = vsel %vm456, %v642, 0
    %649 = vmatprep.subr.mxu0 0.0
    %650 = vmatpush1.msra.mxu0 %v313
    %651 = vmatprep.subr.mxu0 0.0
    %652 = vmatpush1.msra.mxu0 %v316
    %653 = vmatprep.subr.mxu0 0.0
    %654 = vmatpush1.msra.mxu0 0.0
    %655 = vmatprep.subr.mxu0 0.0
    %656 = vmatpush1.msra.mxu0 0.0
    %657 = vmatprep.subr.mxu0 0.0
    %658 = vmatpush1.msra.mxu0 0.0
    %659 = vmatprep.subr.mxu0 0.0
    %660 = vmatpush1.msra.mxu0 0.0
    %661 = vmatprep.subr.mxu0 0.0
    %662 = vmatpush1.msra.mxu0 0.0
    %663 = vmatprep.subr.mxu0 0.0
    %664 = vmatpush1.msra.mxu0 0.0
    %665 = vmatprep.subr.mxu0 0.0
    %666 = vmatpush1.msra.mxu0 0.0
    %667 = vmatprep.subr.mxu0 0.0
    %668 = vmatpush1.msra.mxu0 0.0
    %669 = vmatprep.subr.mxu0 0.0
    %670 = vmatpush1.msra.mxu0 0.0
    %671 = vmatprep.subr.mxu0 0.0
    %672 = vmatpush1.msra.mxu0 0.0
    %673 = vmatprep.subr.mxu0 0.0
    %674 = vmatpush1.msra.mxu0 0.0
    %675 = vmatprep.subr.mxu0 0.0
    %676 = vmatpush1.msra.mxu0 0.0
    %677 = vmatprep.subr.mxu0 0.0
    %678 = vmatpush1.msra.mxu0 0.0
    %679 = vmatprep.subr.mxu0 0.0
    %680 = vmatpush1.msra.mxu0 0.0
    %681 = vmatprep.subr.mxu0 0.0
    %682 = vmatpush1.msra.mxu0 0.0
    %683 = vmatprep.subr.mxu0 0.0
    %684 = vmatpush1.msra.mxu0 0.0
    %685 = vmatprep.subr.mxu0 0.0
    %686 = vmatpush1.msra.mxu0 0.0
    %687 = vmatprep.subr.mxu0 0.0
    %688 = vmatpush1.msra.mxu0 0.0
    %689 = vmatprep.subr.mxu0 0.0
    %690 = vmatpush1.msra.mxu0 0.0
    %691 = vmatprep.subr.mxu0 0.0
    %692 = vmatpush1.msra.mxu0 0.0
    %693 = vmatprep.subr.mxu0 0.0
    %694 = vmatpush1.msra.mxu0 0.0
    %695 = vmatprep.subr.mxu0 0.0
    %696 = vmatpush1.msra.mxu0 0.0
    %697 = vmatprep.subr.mxu0 0.0
    %698 = vmatpush1.msra.mxu0 0.0
    %699 = vmatprep.subr.mxu0 0.0
    %700 = vmatpush1.msra.mxu0 0.0
    %701 = vmatprep.subr.mxu0 0.0
    %702 = vmatpush1.msra.mxu0 0.0
    %703 = vmatprep.subr.mxu0 0.0
    %704 = vmatpush1.msra.mxu0 0.0
    %705 = vmatprep.subr.mxu0 0.0
    %706 = vmatpush1.msra.mxu0 0.0
    %707 = vmatprep.subr.mxu0 0.0
    %708 = vmatpush1.msra.mxu0 0.0
    %709 = vmatprep.subr.mxu0 0.0
    %710 = vmatpush1.msra.mxu0 0.0
    %711 = vmatprep.subr.mxu0 0.0
    %712 = vmatpush1.msra.mxu0 0.0
    %713 = vmatprep.mubr.f32.mxu0 0.0
    %714 = vmatmul.mubr.f32.gmra.mrb[0].mxu0 %v644
    %v715 = vpop.f32.mrb[0].mxu0
    %v716 = vadd.f32 0.0, %v715
    %v717 = vpop.f32.mrb[0].mxu0
    %718 = vmatprep.mubr.f32.mxu0 0.0
    %719 = vmatmul.mubr.f32.gmra.mrb[0].mxu0 %v647
    %v720 = vpop.f32.mrb[0].mxu0
    %v721 = vadd.f32 0.0, %v720
    %v722 = vpop.f32.mrb[0].mxu0
    %723 = vdwg.mxu0
    %v724 = vld [vmem:[%s3] sm:$0xf]
    %v725 = vld [vmem:[%s3 + $0x4] sm:$0xf]
    %v726 = vld [vmem:[%s3 + $0x8] sm:$0xf]
    %v727 = vld [vmem:[%s3 + $0xc] sm:$0xf]
    %v728 = vld [vmem:[%s3 + $0x10] sm:$0xf]
    %v729 = vld [vmem:[%s3 + $0x14] sm:$0xf]
    %v730 = vld [vmem:[%s3 + $0x18] sm:$0xf]
    %v731 = vld [vmem:[%s3 + $0x1c] sm:$0xf]
    %v736 = vunpack.c.l.b16 %v728
    %v737 = vunpack.c.l.b16 %v729
    %v738 = vunpack.c.l.b16 %v730
    %v739 = vunpack.c.l.b16 %v731
    %v740 = vpack.c.b16 %v737, %v736
    %v741 = vpack.c.b16 %v739, %v738
    %v745 = vsel %vm46, %v716, 0
    %v748 = vsel %vm46, %v721, 0
    %750 = vmatprep.subr.bf16.mxu0 0
    %751 = vmatpush1.bf16.msra.mxu0 %v740
    %752 = vmatprep.subr.bf16.mxu0 0
    %753 = vmatpush1.bf16.msra.mxu0 %v741
    %754 = vmatprep.subr.bf16.mxu0 0
    %755 = vmatpush1.bf16.msra.mxu0 0
    %756 = vmatprep.subr.bf16.mxu0 0
    %757 = vmatpush1.bf16.msra.mxu0 0
    %758 = vmatprep.subr.bf16.mxu0 0
    %759 = vmatpush1.bf16.msra.mxu0 0
    %760 = vmatprep.subr.bf16.mxu0 0
    %761 = vmatpush1.bf16.msra.mxu0 0
    %762 = vmatprep.subr.bf16.mxu0 0
    %763 = vmatpush1.bf16.msra.mxu0 0
    %764 = vmatprep.subr.bf16.mxu0 0
    %765 = vmatpush1.bf16.msra.mxu0 0
    %766 = vmatprep.subr.bf16.mxu0 0
    %767 = vmatpush1.bf16.msra.mxu0 0
    %768 = vmatprep.subr.bf16.mxu0 0
    %769 = vmatpush1.bf16.msra.mxu0 0
    %770 = vmatprep.subr.bf16.mxu0 0
    %771 = vmatpush1.bf16.msra.mxu0 0
    %772 = vmatprep.subr.bf16.mxu0 0
    %773 = vmatpush1.bf16.msra.mxu0 0
    %774 = vmatprep.subr.bf16.mxu0 0
    %775 = vmatpush1.bf16.msra.mxu0 0
    %776 = vmatprep.subr.bf16.mxu0 0
    %777 = vmatpush1.bf16.msra.mxu0 0
    %778 = vmatprep.subr.bf16.mxu0 0
    %779 = vmatpush1.bf16.msra.mxu0 0
    %780 = vmatprep.subr.bf16.mxu0 0
    %781 = vmatpush1.bf16.msra.mxu0 0
    %782 = vmatprep.mubr.f32.mxu0 0.0
    %783 = vmatmul.mubr.f32.gmra.mrb[0].mxu0 %v745
    %v784 = vpop.f32.mrb[0].mxu0
    %v785 = vadd.f32 0.0, %v784
    %v786 = vpop.f32.mrb[0].mxu0
    %787 = vmatprep.mubr.f32.mxu0 0.0
    %788 = vmatmul.mubr.f32.gmra.mrb[0].mxu0 %v748
    %v789 = vpop.f32.mrb[0].mxu0
    %v790 = vadd.f32 0.0, %v789
    %v791 = vpop.f32.mrb[0].mxu0
    %792 = vdwg.mxu0
    %v797 = vunpack.c.l.b16 %v724
    %v798 = vunpack.c.l.b16 %v725
    %v799 = vunpack.c.l.b16 %v726
    %v800 = vunpack.c.l.b16 %v727
    %v801 = vpack.c.b16 %v798, %v797
    %v802 = vpack.c.b16 %v800, %v799
    %v806 = vsel %vm46, %v530, 0
    %v809 = vsel %vm46, %v535, 0
    %811 = vmatprep.subr.bf16.mxu0 0
    %812 = vmatpush1.bf16.msra.mxu0 %v801
    %813 = vmatprep.subr.bf16.mxu0 0
    %814 = vmatpush1.bf16.msra.mxu0 %v802
    %815 = vmatprep.subr.bf16.mxu0 0
    %816 = vmatpush1.bf16.msra.mxu0 0
    %817 = vmatprep.subr.bf16.mxu0 0
    %818 = vmatpush1.bf16.msra.mxu0 0
    %819 = vmatprep.subr.bf16.mxu0 0
    %820 = vmatpush1.bf16.msra.mxu0 0
    %821 = vmatprep.subr.bf16.mxu0 0
    %822 = vmatpush1.bf16.msra.mxu0 0
    %823 = vmatprep.subr.bf16.mxu0 0
    %824 = vmatpush1.bf16.msra.mxu0 0
    %825 = vmatprep.subr.bf16.mxu0 0
    %826 = vmatpush1.bf16.msra.mxu0 0
    %827 = vmatprep.subr.bf16.mxu0 0
    %828 = vmatpush1.bf16.msra.mxu0 0
    %829 = vmatprep.subr.bf16.mxu0 0
    %830 = vmatpush1.bf16.msra.mxu0 0
    %831 = vmatprep.subr.bf16.mxu0 0
    %832 = vmatpush1.bf16.msra.mxu0 0
    %833 = vmatprep.subr.bf16.mxu0 0
    %834 = vmatpush1.bf16.msra.mxu0 0
    %835 = vmatprep.subr.bf16.mxu0 0
    %836 = vmatpush1.bf16.msra.mxu0 0
    %837 = vmatprep.subr.bf16.mxu0 0
    %838 = vmatpush1.bf16.msra.mxu0 0
    %839 = vmatprep.subr.bf16.mxu0 0
    %840 = vmatpush1.bf16.msra.mxu0 0
    %841 = vmatprep.subr.bf16.mxu0 0
    %842 = vmatpush1.bf16.msra.mxu0 0
    %843 = vmatprep.mubr.f32.mxu0 0.0
    %844 = vmatmul.mubr.f32.gmra.mrb[0].mxu0 %v806
    %v845 = vpop.f32.mrb[0].mxu0
    %v846 = vadd.f32 %v785, %v845
    %v847 = vpop.f32.mrb[0].mxu0
    %848 = vmatprep.mubr.f32.mxu0 0.0
    %849 = vmatmul.mubr.f32.gmra.mrb[0].mxu0 %v809
    %v850 = vpop.f32.mrb[0].mxu0
    %v851 = vadd.f32 %v790, %v850
    %v852 = vpop.f32.mrb[0].mxu0
    %853 = vdwg.mxu0
    %v854 = vpack.c.bf16 %v851, %v846
    %v856 = vunpack.c.l.b16 %v854
    %v857 = vunpack.c.h.b16 %v854
    %v858 = vpack.c.b16 %v856, %v856
    %v859 = vpack.c.b16 %v857, %v857
    %862 = vst [vmem:[%s4] sm:$0xf] %v858
    %863 = vst [vmem:[%s4 + $0x4] sm:$0xf] %v859
    %v864 = vld [vmem:[%s2 + $0x50] sm:$0xf]
    %v865 = vld [vmem:[%s2 + $0x54] sm:$0xf]
    %v866 = vld [vmem:[%s2 + $0x58] sm:$0xf]
    %v867 = vld [vmem:[%s2 + $0x5c] sm:$0xf]
    %v872 = vunpack.c.l.b16 %v864
    %v873 = vunpack.c.l.b16 %v865
    %v874 = vunpack.c.l.b16 %v866
    %v875 = vunpack.c.l.b16 %v867
    %v876 = vpack.c.b16 %v873, %v872
    %v877 = vpack.c.b16 %v875, %v874
    %880 = vmatprep.subr.bf16.mxu0 0
    %881 = vmatpush1.bf16.msra.mxu0 %v876
    %882 = vmatprep.subr.bf16.mxu0 0
    %883 = vmatpush1.bf16.msra.mxu0 %v877
    %884 = vmatprep.subr.bf16.mxu0 0
    %885 = vmatpush1.bf16.msra.mxu0 0
    %886 = vmatprep.subr.bf16.mxu0 0
    %887 = vmatpush1.bf16.msra.mxu0 0
    %888 = vmatprep.subr.bf16.mxu0 0
    %889 = vmatpush1.bf16.msra.mxu0 0
    %890 = vmatprep.subr.bf16.mxu0 0
    %891 = vmatpush1.bf16.msra.mxu0 0
    %892 = vmatprep.subr.bf16.mxu0 0
    %893 = vmatpush1.bf16.msra.mxu0 0
    %894 = vmatprep.subr.bf16.mxu0 0
    %895 = vmatpush1.bf16.msra.mxu0 0
    %896 = vmatprep.subr.bf16.mxu0 0
    %897 = vmatpush1.bf16.msra.mxu0 0
    %898 = vmatprep.subr.bf16.mxu0 0
    %899 = vmatpush1.bf16.msra.mxu0 0
    %900 = vmatprep.subr.bf16.mxu0 0
    %901 = vmatpush1.bf16.msra.mxu0 0
    %902 = vmatprep.subr.bf16.mxu0 0
    %903 = vmatpush1.bf16.msra.mxu0 0
    %904 = vmatprep.subr.bf16.mxu0 0
    %905 = vmatpush1.bf16.msra.mxu0 0
    %906 = vmatprep.subr.bf16.mxu0 0
    %907 = vmatpush1.bf16.msra.mxu0 0
    %908 = vmatprep.subr.bf16.mxu0 0
    %909 = vmatpush1.bf16.msra.mxu0 0
    %910 = vmatprep.subr.bf16.mxu0 0
    %911 = vmatpush1.bf16.msra.mxu0 0
    %912 = vmatprep.mubr.f32.mxu0 0.0
    %913 = vmatmul.mubr.f32.gmra.mrb[0].mxu0 %v806
    %v914 = vpop.f32.mrb[0].mxu0
    %v915 = vadd.f32 0.0, %v914
    %v916 = vpop.f32.mrb[0].mxu0
    %917 = vmatprep.mubr.f32.mxu0 0.0
    %918 = vmatmul.mubr.f32.gmra.mrb[0].mxu0 %v809
    %v919 = vpop.f32.mrb[0].mxu0
    %v920 = vadd.f32 0.0, %v919
    %v921 = vpop.f32.mrb[0].mxu0
    %922 = vdwg.mxu0
    %v923 = vld [vmem:[%s2 + $0x60] sm:$0xf]
    %v924 = vld [vmem:[%s2 + $0x64] sm:$0xf]
    %v925 = vld [vmem:[%s2 + $0x68] sm:$0xf]
    %v926 = vld [vmem:[%s2 + $0x6c] sm:$0xf]
    %v931 = vunpack.c.l.b16 %v923
    %v932 = vunpack.c.l.b16 %v924
    %v933 = vunpack.c.l.b16 %v925
    %v934 = vunpack.c.l.b16 %v926
    %v935 = vpack.c.b16 %v932, %v931
    %v936 = vpack.c.b16 %v934, %v933
    %939 = vmatprep.subr.bf16.mxu0 0
    %940 = vmatpush1.bf16.msra.mxu0 %v935
    %941 = vmatprep.subr.bf16.mxu0 0
    %942 = vmatpush1.bf16.msra.mxu0 %v936
    %943 = vmatprep.subr.bf16.mxu0 0
    %944 = vmatpush1.bf16.msra.mxu0 0
    %945 = vmatprep.subr.bf16.mxu0 0
    %946 = vmatpush1.bf16.msra.mxu0 0
    %947 = vmatprep.subr.bf16.mxu0 0
    %948 = vmatpush1.bf16.msra.mxu0 0
    %949 = vmatprep.subr.bf16.mxu0 0
    %950 = vmatpush1.bf16.msra.mxu0 0
    %951 = vmatprep.subr.bf16.mxu0 0
    %952 = vmatpush1.bf16.msra.mxu0 0
    %953 = vmatprep.subr.bf16.mxu0 0
    %954 = vmatpush1.bf16.msra.mxu0 0
    %955 = vmatprep.subr.bf16.mxu0 0
    %956 = vmatpush1.bf16.msra.mxu0 0
    %957 = vmatprep.subr.bf16.mxu0 0
    %958 = vmatpush1.bf16.msra.mxu0 0
    %959 = vmatprep.subr.bf16.mxu0 0
    %960 = vmatpush1.bf16.msra.mxu0 0
    %961 = vmatprep.subr.bf16.mxu0 0
    %962 = vmatpush1.bf16.msra.mxu0 0
    %963 = vmatprep.subr.bf16.mxu0 0
    %964 = vmatpush1.bf16.msra.mxu0 0
    %965 = vmatprep.subr.bf16.mxu0 0
    %966 = vmatpush1.bf16.msra.mxu0 0
    %967 = vmatprep.subr.bf16.mxu0 0
    %968 = vmatpush1.bf16.msra.mxu0 0
    %969 = vmatprep.subr.bf16.mxu0 0
    %970 = vmatpush1.bf16.msra.mxu0 0
    %971 = vmatprep.mubr.f32.mxu0 0.0
    %972 = vmatmul.mubr.f32.gmra.mrb[0].mxu0 %v745
    %v973 = vpop.f32.mrb[0].mxu0
    %v974 = vadd.f32 0.0, %v973
    %v975 = vpop.f32.mrb[0].mxu0
    %976 = vmatprep.mubr.f32.mxu0 0.0
    %977 = vmatmul.mubr.f32.gmra.mrb[0].mxu0 %v748
    %v978 = vpop.f32.mrb[0].mxu0
    %v979 = vadd.f32 0.0, %v978
    %v980 = vpop.f32.mrb[0].mxu0
    %981 = vdwg.mxu0
    %v982 = vsub.f32 %v974, %v915
    %v983 = vsub.f32 %v979, %v920
    %v984 = vmul.f32 %v982, %v982
    %v985 = vmul.f32 %v983, %v983
    %v986 = vsel %vm46, %v984, 0.0
    %987 = vadd.xlane.f32.xlu0 %v986
    %v988 = vpop.xlane.xlu0 %987
    %v989 = vsel %vm46, %v985, 0.0
    %990 = vadd.xlane.f32.xlu0 %v989
    %v991 = vpop.xlane.xlu0 %990
    %v992 = vrsqrt.pop %v988
    %v993 = vmul.f32 %v988, %v992
    %vm994 = vcmp.eq.f32.partialorder %v988, inf
    %v995 = vsel %vm994, %v988, %v993
    %vm996 = vcmp.eq.f32.partialorder %v988, 0.0
    %v997 = vand.u32 %v988, 2147483648
    %v998 = vsel %vm996, %v997, %v995
    %v999 = vrsqrt.pop %v991
    %v1000 = vmul.f32 %v991, %v999
    %vm1001 = vcmp.eq.f32.partialorder %v991, inf
    %v1002 = vsel %vm1001, %v991, %v1000
    %vm1003 = vcmp.eq.f32.partialorder %v991, 0.0
    %v1004 = vand.u32 %v991, 2147483648
    %v1005 = vsel %vm1003, %v1004, %v1002
    %vm1006 = vcmask 7168
    %v1007 = vsel %vm1006, %v998, 0.0
    %v1008 = vsel %vm1006, %v1005, 0.0
    %v1009 = vadd.f32 %v1007, %v1008
    %1010 = vadd.xlane.f32.xlu0 %v1009
    %v1011 = vpop.xlane.xlu0 %1010
    %v1012 = vrot.slane %v1011, 4
    %v1013 = vadd.f32 %v1011, %v1012
    %v1014 = vrot.slane %v1013, 2
    %v1015 = vadd.f32 %v1013, %v1014
    %v1016 = vrot.slane %v1015, 1
    %v1017 = vadd.f32 %v1015, %v1016
    %s1018 = vtos %v1017
    %s1019 = smul.f32 %s1018, 0.011048543
    %s1020 = scalar_lea.smem [#allocation2], 0
    %1021 = sst [smem:[%s1020]] %s1019
    // Predicated region
    $region18: #{_fused_forward.1} parent=1 // pred_check
      _
    $region19: #{_fused_forward.1} parent=1 // pred_check_branch
      %1023 = sbr.rel (0) target = $region21
    $region20: #{_fused_forward.1} parent=1 // pred_region
      _
    $region21: #{_fused_forward.1} parent=1 // pred_fallthru
      _
    // Predicated region
    $region22: #{_fused_forward.1} parent=1 // pred_check
      _
    $region23: #{_fused_forward.1} parent=1 // pred_check_branch
      %1025 = sbr.rel (0) target = $region25
    $region24: #{_fused_forward.1} parent=1 // pred_region
      %s1027 = ssub.s32 16, 16
      %1028 = vsyncadd [#allocation3], %s1027
      %1031 = dma.smem_to_hbm [#allocation2], 16, %s5, [#allocation3]
    $region25: #{_fused_forward.1} parent=1 // pred_fallthru
      _
    // Predicated region
    $region26: #{_fused_forward.1} parent=1 // pred_check
      _
    $region27: #{_fused_forward.1} parent=1 // pred_check_branch
      %1033 = sbr.rel (0) target = $region29
    $region28: #{_fused_forward.1} parent=1 // pred_region
      _
    $region29: #{_fused_forward.1} parent=1 // pred_fallthru
      _
    // Predicated region
    $region30: #{_fused_forward.1} parent=1 // pred_check
      _
    $region31: #{_fused_forward.1} parent=1 // pred_check_branch
      %1035 = sbr.rel (0) target = $region33
    $region32: #{_fused_forward.1} parent=1 // pred_region
      %1036 = dma.done [#allocation3], 16
    $region33: #{_fused_forward.1} parent=1 // pred_fallthru
      _
    %1037 = sfence
    %1038 = vsyncpa [#allocation3], 1

</llo_original>
